<compile_context>
chip_gen: v7x
topology: tpu7x:2x2x1
jax: 0.10.0
libtpu: 0.0.40
codegen_flags: <defaults>
</compile_context>

<pallas_src>
import functools

import jax
import jax.numpy as jnp
from jax.experimental import pallas as pl
from jax.experimental.pallas import tpu as pltpu

IN_FEATURES = 100      # fixed by the module: nn.Linear(100, num_classes)
MAX_TB = 8192          # max batch-tile rows (safe for v7x VMEM, big enough for v5e/v6e)
MIN_SPLIT = 2048       # force >=2 grid steps (2-TC sharding on v7x) above this batch


def _round_up(x, m):
    return ((x + m - 1) // m) * m


def _cdiv(a, b):
    return -(-a // b)


def linear_kernel(x_ref, wt_ref, b_ref, o_ref):
    # One MXU pass (f32 in, f32 accumulate) + broadcast bias add.
    acc = jnp.dot(x_ref[...], wt_ref[...], preferred_element_type=jnp.float32)
    o_ref[...] = (acc + b_ref[...]).astype(o_ref.dtype)


def prepare_params(weight, bias):
    """Transpose/reshape the Linear parameters once (they are static at inference).

    weight: [num_classes, 100] f32, bias: [num_classes] f32
    Returns wt: [100, num_classes] f32, b2: [1, num_classes] f32.
    """
    wt = jnp.asarray(weight, dtype=jnp.float32).T          # (K, N)
    b2 = jnp.asarray(bias, dtype=jnp.float32).reshape(1, -1)  # (1, N)
    return wt, b2


@jax.jit
def clip4clip_forward(x, wt, b2):
    """x: [B, 100] f32 -> logits: [B, num_classes] f32."""
    B, K = x.shape
    Kw, N = wt.shape
    assert K == Kw == IN_FEATURES

    # Balanced batch tiling: rows rounded to 8 (f32 sublane), grid of near-equal
    # tiles capped at MAX_TB rows, >= 2 steps when the batch is large (megacore).
    b8 = _round_up(B, 8)
    nt = _cdiv(b8, MAX_TB)
    if b8 >= 2 * MIN_SPLIT:
        nt = max(nt, 2)
    tb = _round_up(_cdiv(b8, nt), 8)
    b_pad = _round_up(b8, tb)
    grid = (b_pad // tb,)

    if b_pad != B:
        x = jnp.pad(x, ((0, b_pad - B), (0, 0)))

    out = pl.pallas_call(
        linear_kernel,
        out_shape=jax.ShapeDtypeStruct((b_pad, N), jnp.float32),
        grid=grid,
        in_specs=[
            pl.BlockSpec((tb, K), lambda i: (i, 0)),    # x: streamed over batch
            pl.BlockSpec((K, N), lambda i: (0, 0)),     # W^T: VMEM-resident, DMA'd once
            pl.BlockSpec((1, N), lambda i: (0, 0)),     # bias: VMEM-resident
        ],
        out_specs=pl.BlockSpec((tb, N), lambda i: (i, 0)),
        compiler_params=pltpu.CompilerParams(
            dimension_semantics=("parallel",),          # 2-TC sharding on v7x
            vmem_limit_bytes=32 * 1024 * 1024,
        ),
    )(x, wt, b2)

    if b_pad != B:
        out = out[:B]
    return out


if __name__ == "__main__":
    batch = 8
    num_classes = 16

    key = jax.random.PRNGKey(0)
    kx, kw, kb = jax.random.split(key, 3)

    # Deterministic synthetic parameters (matching nn.Linear shapes).
    x = jax.random.normal(kx, (batch, IN_FEATURES), dtype=jnp.float32)
    weight = jax.random.normal(kw, (num_classes, IN_FEATURES), dtype=jnp.float32) * 0.1
    bias = jax.random.normal(kb, (num_classes,), dtype=jnp.float32) * 0.1

    # Hoisted once (static at inference time).
    wt, b2 = prepare_params(weight, bias)

    logits = clip4clip_forward(x, wt, b2)
    logits = jax.block_until_ready(logits)

    # Full-f32 reference (kernel keeps f32 end to end).
    ref = jnp.dot(x, weight.T) + bias
    assert logits.shape == (batch, num_classes)
    assert jnp.allclose(logits, ref, atol=1e-3, rtol=1e-3)

    print("KERNEL_OK")
</pallas_src>

<mosaic_0001>
module attributes {stable_mosaic.version = 11 : i64} {
  func.func @linear_kernel(%arg0: i32, %arg1: memref<8x100xf32, #tpu.memory_space<vmem>>, %arg2: memref<100x16xf32, #tpu.memory_space<vmem>>, %arg3: memref<1x16xf32, #tpu.memory_space<vmem>>, %arg4: memref<8x16xf32, #tpu.memory_space<vmem>>) attributes {dimension_semantics = [#tpu.dimension_semantics<parallel>], iteration_bounds = array<i64: 1>, scalar_prefetch = 0 : i64, scratch_operands = 0 : i64, tpu.core_type = #tpu.core_type<tc>, window_params = [{transform_indices = @transform_0, window_bounds = array<i64: 8, 100>}, {pipeline_mode = #tpu.pipeline_mode<synchronous>, transform_indices = @transform_1, window_bounds = array<i64: 100, 16>}, {pipeline_mode = #tpu.pipeline_mode<synchronous>, transform_indices = @transform_2, window_bounds = array<i64: 1, 16>}, {transform_indices = @transform_3, window_bounds = array<i64: 8, 16>}]} {
    %c0 = arith.constant 0 : index
    %c0_0 = arith.constant 0 : index
    %0 = vector.load %arg1[%c0, %c0_0] : memref<8x100xf32, #tpu.memory_space<vmem>>, vector<8x100xf32>
    %c0_1 = arith.constant 0 : index
    %c0_2 = arith.constant 0 : index
    %1 = vector.load %arg2[%c0_1, %c0_2] : memref<100x16xf32, #tpu.memory_space<vmem>>, vector<100x16xf32>
    %cst = arith.constant dense<0.000000e+00> : vector<8x16xf32>
    %2 = tpu.matmul %0, %1, %cst {dimension_numbers = #tpu.dot_dimension_numbers<[1], [0], [0], [1], [0, 0, 1, 1], [], []>} : vector<8x100xf32>, vector<100x16xf32>, vector<8x16xf32> -> vector<8x16xf32>
    %c0_3 = arith.constant 0 : index
    %c0_4 = arith.constant 0 : index
    %3 = vector.load %arg3[%c0_3, %c0_4] : memref<1x16xf32, #tpu.memory_space<vmem>>, vector<1x16xf32>
    %4 = vector.broadcast %3 : vector<1x16xf32> to vector<8x16xf32>
    %5 = arith.addf %2, %4 : vector<8x16xf32>
    %c0_5 = arith.constant 0 : index
    %c0_6 = arith.constant 0 : index
    %6 = vector.load %arg4[%c0_5, %c0_6] : memref<8x16xf32, #tpu.memory_space<vmem>>, vector<8x16xf32>
    tpu.vector_store %arg4[%c0_5, %c0_6], %5 {strides = array<i32>} : memref<8x16xf32, #tpu.memory_space<vmem>>, vector<8x16xf32>,
    return
  }
  func.func @transform_0(%arg0: i32) -> (i32, i32) {
    %c0_i32 = arith.constant 0 : i32
    %c0_i32_0 = arith.constant 0 : i32
    return %arg0, %c0_i32 : i32, i32
  }
  func.func @transform_1(%arg0: i32) -> (i32, i32) {
    %c0_i32 = arith.constant 0 : i32
    %c0_i32_0 = arith.constant 0 : i32
    %c0_i32_1 = arith.constant 0 : i32
    return %c0_i32, %c0_i32_0 : i32, i32
  }
  func.func @transform_2(%arg0: i32) -> (i32, i32) {
    %c0_i32 = arith.constant 0 : i32
    %c0_i32_0 = arith.constant 0 : i32
    %c0_i32_1 = arith.constant 0 : i32
    return %c0_i32, %c0_i32_0 : i32, i32
  }
  func.func @transform_3(%arg0: i32) -> (i32, i32) {
    %c0_i32 = arith.constant 0 : i32
    %c0_i32_0 = arith.constant 0 : i32
    return %arg0, %c0_i32 : i32, i32
  }
}

</mosaic_0001>

<llo_original>
// kernel: clip4clip_forward.1
$region0: #{clip4clip_forward.1}
  #allocation0 [shape = 'u32[]', space=smem, size = 0x4, offset = 0x4, fixed_abs, tag = 'smem constant byte address 0x4 - core index']
  #allocation1 [shape = 'u32[144,128]{1,0:T(1,128)}', space=vmem, size = 0x12000, scoped, tag = 'internal scratch']
  %s0 = inlined_call_operand.vmem [shape: f32[8,100], index: 0, kind: input, shape index: {}]
  %s1 = inlined_call_operand.vmem [shape: f32[100,16], index: 1, kind: input, shape index: {}]
  %s2 = inlined_call_operand.vmem [shape: f32[1,16], index: 2, kind: input, shape index: {}]
  %s3 = inlined_call_operand.hbm [shape: f32[8,16], index: 3, kind: output, shape index: {}]
  %s4 = sld [smem:[#allocation0]]
  $region22: #{clip4clip_forward.1} parent=0
    _
  %s6 = ssub.s32 1, %s4
  %s7 = scalar_select 0, %s6, %s4
  $region1: #{clip4clip_forward.1} parent=0
    #allocation2 [shape = 'u8[4096]{0}', space=vmem, size = 0x1000, scoped, tag = 'output window, operand 0, single buffered']
    #allocation3 [shape = 's32[1]{0}', space=sflag, size = 0x4, scoped, tag = 'scoped memory for clip4clip_forward.1']
    %8 = vsyncpa [#allocation3], 0
    // Predicated region
    $region2: #{clip4clip_forward.1} parent=1 // pred_check
      _
    $region3: #{clip4clip_forward.1} parent=1 // pred_check_branch
      %10 = sbr.rel (0) target = $region5
    $region4: #{clip4clip_forward.1} parent=1 // pred_region
      _
    $region5: #{clip4clip_forward.1} parent=1 // pred_fallthru
      _
    // Predicated region
    $region6: #{clip4clip_forward.1} parent=1 // pred_check
      _
    $region7: #{clip4clip_forward.1} parent=1 // pred_check_branch
      %12 = sbr.rel (0) target = $region9
    $region8: #{clip4clip_forward.1} parent=1 // pred_region
      _
    $region9: #{clip4clip_forward.1} parent=1 // pred_fallthru
      _
    // Predicated region
    $region10: #{clip4clip_forward.1} parent=1 // pred_check
      _
    $region11: #{clip4clip_forward.1} parent=1 // pred_check_branch
      %14 = sbr.rel (0) target = $region13
    $region12: #{clip4clip_forward.1} parent=1 // pred_region
      _
    $region13: #{clip4clip_forward.1} parent=1 // pred_fallthru
      _
    %v15 = vld [vmem:[%s0] sm:$0xff]
    %v16 = vld [vmem:[%s1] sm:$0xff]
    %v17 = vld [vmem:[%s1 + $0x8] sm:$0xff]
    %v18 = vld [vmem:[%s1 + $0x10] sm:$0xff]
    %v19 = vld [vmem:[%s1 + $0x18] sm:$0xff]
    %v20 = vld [vmem:[%s1 + $0x20] sm:$0xff]
    %v21 = vld [vmem:[%s1 + $0x28] sm:$0xff]
    %v22 = vld [vmem:[%s1 + $0x30] sm:$0xff]
    %v23 = vld [vmem:[%s1 + $0x38] sm:$0xff]
    %v24 = vld [vmem:[%s1 + $0x40] sm:$0xff]
    %v25 = vld [vmem:[%s1 + $0x48] sm:$0xff]
    %v26 = vld [vmem:[%s1 + $0x50] sm:$0xff]
    %v27 = vld [vmem:[%s1 + $0x58] sm:$0xff]
    %v28 = vld [vmem:[%s1 + $0x60] sm:$0xf]
    %v29 = vld [vmem:[%s2] sm:$0x1]
    %v31 = vlaneseq
    %v32 = vshrl.u32 %v31, 7
    %v33 = vsub.s32 0, %v32
    %v34 = vrot.slane %v29, %v33
    %vm36 = vcmask 818176
    %v38 = vsel %vm36, %v15, 0
    %vm40 = vcmask 1043456
    %v42 = vsel %vm40, %v28, 0
    %44 = vmatprep.subr.mxu0 0.0
    %45 = vmatpush1.msra.mxu0 %v16
    %46 = vmatprep.subr.mxu0 0.0
    %47 = vmatpush1.msra.mxu0 %v17
    %48 = vmatprep.subr.mxu0 0.0
    %49 = vmatpush1.msra.mxu0 %v18
    %50 = vmatprep.subr.mxu0 0.0
    %51 = vmatpush1.msra.mxu0 %v19
    %52 = vmatprep.subr.mxu0 0.0
    %53 = vmatpush1.msra.mxu0 %v20
    %54 = vmatprep.subr.mxu0 0.0
    %55 = vmatpush1.msra.mxu0 %v21
    %56 = vmatprep.subr.mxu0 0.0
    %57 = vmatpush1.msra.mxu0 %v22
    %58 = vmatprep.subr.mxu0 0.0
    %59 = vmatpush1.msra.mxu0 %v23
    %60 = vmatprep.subr.mxu0 0.0
    %61 = vmatpush1.msra.mxu0 %v24
    %62 = vmatprep.subr.mxu0 0.0
    %63 = vmatpush1.msra.mxu0 %v25
    %64 = vmatprep.subr.mxu0 0.0
    %65 = vmatpush1.msra.mxu0 %v26
    %66 = vmatprep.subr.mxu0 0.0
    %67 = vmatpush1.msra.mxu0 %v27
    %68 = vmatprep.subr.mxu0 0.0
    %69 = vmatpush1.msra.mxu0 %v42
    %70 = vmatprep.subr.mxu0 0.0
    %71 = vmatpush1.msra.mxu0 0.0
    %72 = vmatprep.subr.mxu0 0.0
    %73 = vmatpush1.msra.mxu0 0.0
    %74 = vmatprep.subr.mxu0 0.0
    %75 = vmatpush1.msra.mxu0 0.0
    %76 = vmatprep.subr.mxu0 0.0
    %77 = vmatpush1.msra.mxu0 0.0
    %78 = vmatprep.subr.mxu0 0.0
    %79 = vmatpush1.msra.mxu0 0.0
    %80 = vmatprep.subr.mxu0 0.0
    %81 = vmatpush1.msra.mxu0 0.0
    %82 = vmatprep.subr.mxu0 0.0
    %83 = vmatpush1.msra.mxu0 0.0
    %84 = vmatprep.subr.mxu0 0.0
    %85 = vmatpush1.msra.mxu0 0.0
    %86 = vmatprep.subr.mxu0 0.0
    %87 = vmatpush1.msra.mxu0 0.0
    %88 = vmatprep.subr.mxu0 0.0
    %89 = vmatpush1.msra.mxu0 0.0
    %90 = vmatprep.subr.mxu0 0.0
    %91 = vmatpush1.msra.mxu0 0.0
    %92 = vmatprep.subr.mxu0 0.0
    %93 = vmatpush1.msra.mxu0 0.0
    %94 = vmatprep.subr.mxu0 0.0
    %95 = vmatpush1.msra.mxu0 0.0
    %96 = vmatprep.subr.mxu0 0.0
    %97 = vmatpush1.msra.mxu0 0.0
    %98 = vmatprep.subr.mxu0 0.0
    %99 = vmatpush1.msra.mxu0 0.0
    %100 = vmatprep.subr.mxu0 0.0
    %101 = vmatpush1.msra.mxu0 0.0
    %102 = vmatprep.subr.mxu0 0.0
    %103 = vmatpush1.msra.mxu0 0.0
    %104 = vmatprep.subr.mxu0 0.0
    %105 = vmatpush1.msra.mxu0 0.0
    %106 = vmatprep.subr.mxu0 0.0
    %107 = vmatpush1.msra.mxu0 0.0
    %108 = vmatprep.mubr.f32.mxu0 0.0
    %109 = vmatmul.mubr.f32.gmra.mrb[0].mxu0 %v38
    %v110 = vpop.f32.mrb[0].mxu0
    %v111 = vadd.f32 %v34, %v110
    %v112 = vpop.f32.mrb[0].mxu0
    %113 = vdwg.mxu0
    %vm114 = vcmask 130048
    %115 = vst.msk [vmem:[#allocation2] sm:$0xff] %vm114, %v111
    // Predicated region
    $region14: #{clip4clip_forward.1} parent=1 // pred_check
      _
    $region15: #{clip4clip_forward.1} parent=1 // pred_check_branch
      %117 = sbr.rel (0) target = $region17
    $region16: #{clip4clip_forward.1} parent=1 // pred_region
      %s119 = ssub.s32 128, 128
      %120 = vsyncadd [#allocation3], %s119
      %s122 = sshll.u32 [#allocation2], 4
      %s123 = int_to_ptr.vmem [resolvable:$true] %s122
      %125 = dma.vmem_to_hbm [thread:$0]  %s123, 128, %s3, [#allocation3]
    $region17: #{clip4clip_forward.1} parent=1 // pred_fallthru
      _
    // Predicated region
    $region18: #{clip4clip_forward.1} parent=1 // pred_check
      _
    $region19: #{clip4clip_forward.1} parent=1 // pred_check_branch
      %127 = sbr.rel (0) target = $region21
    $region20: #{clip4clip_forward.1} parent=1 // pred_region
      %128 = dma.done [#allocation3], 128
    $region21: #{clip4clip_forward.1} parent=1 // pred_fallthru
      _
    %129 = vsyncpa [#allocation3], 1

</llo_original>
